<compile_context>
chip_gen: v7x
topology: tpu7x:2x2x1
jax: 0.10.0
libtpu: 0.0.40
codegen_flags: <defaults>
</compile_context>

<pallas_src>
import jax
import jax.numpy as jnp
from jax.experimental import pallas as pl
from jax.experimental.pallas import tpu as pltpu

KSIZE = 7
PAD = 3


def _gating_kernel(qc_ref, qr_ref, w_ref, b_ref, out_ref):
    # qc_ref / qr_ref / out_ref : (TILE_B, N, C) block
    # w_ref : (KSIZE*C, 2C) bf16  im2col weight, rows tap-major / c_in-minor
    # b_ref : (1, 2C)       f32   fused cam|rad bias
    tb, n, c = qc_ref.shape
    m = tb * n

    # x: sequences stacked on rows.  Don't keep qc/qr live across the matmul.
    x = (qc_ref[...].astype(jnp.float32)
         + qr_ref[...].astype(jnp.float32)).reshape(m, c)

    # Row position inside its own sequence -> per-batch conv boundary mask.
    pos = jax.lax.broadcasted_iota(jnp.int32, (m, 1), 0) % n

    # Build the (M, 7C) bf16 im2col LHS: each tap shift is an XLU roll plus a
    # VPU boundary mask (zero-padding semantics, no cross-sequence leakage).
    cols = []
    for k in range(KSIZE):
        s = PAD - k                                   # xs[i] = x[i + k - 3] = x[i - s]
        if s == 0:
            xs = x
        else:
            rolled = pltpu.roll(x, shift=s % m, axis=0)
            valid = (pos >= s) & (pos < n + s)        # stay inside this row's sequence
            xs = jnp.where(valid, rolled, 0.0)
        cols.append(xs.astype(jnp.bfloat16))
    lhs = jnp.concatenate(cols, axis=1)               # (M, 7C), lane-aligned (C%128==0)

    # Single fused conv matmul for both branches; bias added once.
    acc = jnp.dot(lhs, w_ref[...], preferred_element_type=jnp.float32) + b_ref[...]

    cam_w = jax.nn.sigmoid(acc[:, :c])                # lane-aligned split
    rad_w = jax.nn.sigmoid(acc[:, c:])

    # Re-read the VMEM-resident inputs for the gating stage (short live ranges).
    qc = qc_ref[...].astype(jnp.float32).reshape(m, c)
    qr = qr_ref[...].astype(jnp.float32).reshape(m, c)
    out = qc * cam_w + qr * rad_w
    out_ref[...] = out.reshape(tb, n, c).astype(out_ref.dtype)


def _pick_tile_b(batch, seq, target_rows=1024, min_grid_steps=2):
    """Largest divisor of `batch` with TILE_B*N <= target_rows, then shrink (still
    dividing batch) until the grid has >= min_grid_steps parallel steps (v7x has
    2 TensorCores; a 1-step grid leaves one idle)."""
    tb = max(1, min(batch, target_rows // max(seq, 1)))
    while batch % tb:
        tb -= 1
    while tb > 1 and batch // tb < min_grid_steps:
        tb -= 1
        while batch % tb:
            tb -= 1
    return tb


def radar_camera_gating(query_c, query_r, w_cam, b_cam, w_rad, b_rad):
    """query_c/query_r: (B, N, C); w_*: torch Conv1d weight (C_out, C_in, 7); b_*: (C,).

    Output dtype == query dtype (pass bf16 queries to halve HBM traffic)."""
    B, N, C = query_c.shape
    assert C % 128 == 0, f"in_channels must be a multiple of 128, got {C}"
    assert N % 8 == 0, f"sequence length must be a multiple of 8, got {N}"

    # im2col weight: Wk[c_in, c_out] = torch_weight[c_out, c_in, k]; fuse cam|rad
    # along c_out, then flatten taps -> rows (tap-major, c_in-minor) to match the
    # lane order of the in-kernel LHS concat.  bf16 halves weight DMA bytes.
    wc = jnp.transpose(w_cam, (2, 1, 0))              # (7, C_in, C_out) cam
    wr = jnp.transpose(w_rad, (2, 1, 0))              # (7, C_in, C_out) rad
    w_im2col = (jnp.concatenate([wc, wr], axis=2)     # (7, C, 2C)
                .reshape(KSIZE * C, 2 * C)            # (7C, 2C), row = k*C + c_in
                .astype(jnp.bfloat16))
    b_cat = jnp.concatenate([b_cam, b_rad]).reshape(1, 2 * C).astype(jnp.float32)

    tile_b = _pick_tile_b(B, N)
    grid = (B // tile_b,)

    qry_spec = pl.BlockSpec((tile_b, N, C), lambda i: (i, 0, 0))
    w_spec = pl.BlockSpec((KSIZE * C, 2 * C), lambda i: (0, 0))
    b_spec = pl.BlockSpec((1, 2 * C), lambda i: (0, 0))

    # Explicit VMEM budget: double-buffered input/output blocks + weights + the
    # in-kernel f32/bf16 temporaries (x, im2col LHS, acc, gating), with headroom.
    # Clamped below v7x's 64 MiB physical VMEM.
    itemsize = jnp.dtype(query_c.dtype).itemsize
    blk_elems = tile_b * N * C
    vmem_est = (
        2 * 2 * blk_elems * itemsize                        # qc, qr (2 bufs each)
        + 2 * blk_elems * itemsize                          # output (2 bufs)
        + 2 * (KSIZE * C) * (2 * C) * 2                     # weights bf16 (2 bufs)
        + 2 * (2 * C) * 4                                   # bias
        + tile_b * N * C * (4 + 2 * KSIZE + 2 * 4 + 2 * 4)  # x, LHS, acc, gating
    )
    vmem_limit = min(max(2 * vmem_est, 8 * 1024 * 1024), 48 * 1024 * 1024)
    # TODO(synk): on v7x, pipeline_mode=pl.Buffered(1) on w_spec would drop the
    # grid-invariant weight's second buffer if VMEM ever becomes tight.

    cost = pl.CostEstimate(
        flops=2 * B * N * (KSIZE * C) * (2 * C),
        transcendentals=2 * B * N * C,
        bytes_accessed=3 * B * N * C * itemsize
        + (KSIZE * C) * (2 * C) * 2 + (2 * C) * 4,
    )

    return pl.pallas_call(
        _gating_kernel,
        out_shape=jax.ShapeDtypeStruct((B, N, C), query_c.dtype),
        grid_spec=pltpu.PrefetchScalarGridSpec(
            num_scalar_prefetch=0,
            grid=grid,
            in_specs=[qry_spec, qry_spec, w_spec, b_spec],
            out_specs=qry_spec,
        ),
        compiler_params=pltpu.CompilerParams(
            dimension_semantics=("parallel",),
            vmem_limit_bytes=vmem_limit,
        ),
        cost_estimate=cost,
    )(query_c, query_r, w_im2col, b_cat)


def _reference(query_c, query_r, w_cam, b_cam, w_rad, b_rad):
    """Pure-JAX f32 reference matching PyTorch Conv1d(k=7, pad=3) semantics."""
    x = (query_c.astype(jnp.float32) + query_r.astype(jnp.float32))   # (B, N, C)
    B, N, C = x.shape
    xp = jnp.pad(x, ((0, 0), (PAD, PAD), (0, 0)))                     # pad seq axis

    def conv(w, b):
        acc = jnp.broadcast_to(b.astype(jnp.float32), (B, N, C))
        for k in range(KSIZE):
            wk = jnp.transpose(w[:, :, k]).astype(jnp.float32)        # (C_in, C_out)
            acc = acc + jnp.einsum('bnc,cd->bnd', xp[:, k:k + N, :], wk)
        return acc

    cam_w = jax.nn.sigmoid(conv(w_cam, b_cam))
    rad_w = jax.nn.sigmoid(conv(w_rad, b_rad))
    return (query_c.astype(jnp.float32) * cam_w
            + query_r.astype(jnp.float32) * rad_w).astype(query_c.dtype)


if __name__ == "__main__":
    key = jax.random.PRNGKey(0)
    B, N, C = 2, 16, 128                                    # small synthetic shapes
    k1, k2, k3, k4, k5, k6 = jax.random.split(key, 6)

    query_c = jax.random.normal(k1, (B, N, C), dtype=jnp.float32)
    query_r = jax.random.normal(k2, (B, N, C), dtype=jnp.float32)

    # Deterministic Conv1d parameters (torch layout: (C_out, C_in, K)), kaiming-ish scale.
    scale = 1.0 / (C * KSIZE) ** 0.5
    w_cam = jax.random.uniform(k3, (C, C, KSIZE), jnp.float32, -scale, scale)
    b_cam = jax.random.uniform(k4, (C,), jnp.float32, -scale, scale)
    w_rad = jax.random.uniform(k5, (C, C, KSIZE), jnp.float32, -scale, scale)
    b_rad = jax.random.uniform(k6, (C,), jnp.float32, -scale, scale)

    # f32 I/O path, checked against the f32 reference.
    out = radar_camera_gating(query_c, query_r, w_cam, b_cam, w_rad, b_rad)
    out = jax.block_until_ready(out)
    ref = _reference(query_c, query_r, w_cam, b_cam, w_rad, b_rad)
    assert out.shape == (B, N, C)
    # bf16 MXU operands (f32 accumulation) -> slightly loosened tolerance vs f32 ref.
    assert jnp.allclose(out, ref, atol=2e-2, rtol=2e-2), "mismatch vs reference (f32 I/O)"

    # bf16 I/O path (halves HBM traffic on v6e where the kernel is HBM-bound).
    qc16, qr16 = query_c.astype(jnp.bfloat16), query_r.astype(jnp.bfloat16)
    out16 = radar_camera_gating(qc16, qr16, w_cam, b_cam, w_rad, b_rad)
    out16 = jax.block_until_ready(out16)
    ref16 = _reference(qc16, qr16, w_cam, b_cam, w_rad, b_rad)
    assert out16.dtype == jnp.bfloat16 and out16.shape == (B, N, C)
    assert jnp.allclose(out16.astype(jnp.float32), ref16.astype(jnp.float32),
                        atol=1e-1, rtol=1e-1), "mismatch vs reference (bf16 I/O)"

    # TODO(synk): auto_fp16 decorator (framework mixed-precision cast of inputs) is a
    # training-framework concern; the wrapper is dtype-preserving (f32 or bf16 queries).
    print("KERNEL_OK")
</pallas_src>

<mosaic_0001>
module attributes {stable_mosaic.version = 11 : i64} {
  func.func @_gating_kernel(%arg0: i32, %arg1: memref<1x16x128xf32, #tpu.memory_space<vmem>>, %arg2: memref<1x16x128xf32, #tpu.memory_space<vmem>>, %arg3: memref<896x256xbf16, #tpu.memory_space<vmem>>, %arg4: memref<1x256xf32, #tpu.memory_space<vmem>>, %arg5: memref<1x16x128xf32, #tpu.memory_space<vmem>>) attributes {dimension_semantics = [#tpu.dimension_semantics<parallel>], iteration_bounds = array<i64: 2>, scalar_prefetch = 0 : i64, scratch_operands = 0 : i64, tpu.core_type = #tpu.core_type<tc>, window_params = [{transform_indices = @transform_0, window_bounds = array<i64: 1, 16, 128>}, {transform_indices = @transform_1, window_bounds = array<i64: 1, 16, 128>}, {pipeline_mode = #tpu.pipeline_mode<synchronous>, transform_indices = @transform_2, window_bounds = array<i64: 896, 256>}, {pipeline_mode = #tpu.pipeline_mode<synchronous>, transform_indices = @transform_3, window_bounds = array<i64: 1, 256>}, {transform_indices = @transform_4, window_bounds = array<i64: 1, 16, 128>}]} {
    %c0 = arith.constant 0 : index
    %c0_0 = arith.constant 0 : index
    %c0_1 = arith.constant 0 : index
    %0 = vector.load %arg1[%c0, %c0_0, %c0_1] : memref<1x16x128xf32, #tpu.memory_space<vmem>>, vector<1x16x128xf32>
    %c0_2 = arith.constant 0 : index
    %c0_3 = arith.constant 0 : index
    %c0_4 = arith.constant 0 : index
    %1 = vector.load %arg2[%c0_2, %c0_3, %c0_4] : memref<1x16x128xf32, #tpu.memory_space<vmem>>, vector<1x16x128xf32>
    %2 = arith.addf %0, %1 : vector<1x16x128xf32>
    %3 = vector.shape_cast %2 : vector<1x16x128xf32> to vector<16x128xf32>
    %4 = tpu.iota {dimensions = array<i32: 0>} : vector<16x1xi32>
    %c16_i32 = arith.constant 16 : i32
    %c0_i32 = arith.constant 0 : i32
    %5 = arith.cmpi eq, %c16_i32, %c0_i32 : i32
    %c1_i32 = arith.constant 1 : i32
    %6 = arith.select %5, %c1_i32, %c16_i32 : i32
    %7 = vector.broadcast %6 : i32 to vector<16x1xi32>
    %8 = arith.remsi %4, %7 : vector<16x1xi32>
    %c0_i32_5 = arith.constant 0 : i32
    %9 = vector.broadcast %c0_i32_5 : i32 to vector<16x1xi32>
    %10 = arith.cmpi ne, %8, %9 : vector<16x1xi32>
    %c0_i32_6 = arith.constant 0 : i32
    %11 = vector.broadcast %c0_i32_6 : i32 to vector<16x1xi32>
    %12 = arith.cmpi slt, %8, %11 : vector<16x1xi32>
    %c0_i32_7 = arith.constant 0 : i32
    %13 = arith.cmpi slt, %6, %c0_i32_7 : i32
    %14 = vector.broadcast %13 : i1 to vector<16x1xi1>
    %15 = vector.broadcast %14 : vector<16x1xi1> to vector<16x1xi1>
    %16 = arith.xori %12, %15 : vector<16x1xi1>
    %17 = arith.andi %16, %10 : vector<16x1xi1>
    %18 = vector.broadcast %6 : i32 to vector<16x1xi32>
    %19 = arith.addi %8, %18 : vector<16x1xi32>
    %20 = arith.select %17, %19, %8 : vector<16x1xi1>, vector<16x1xi32>
    %c3_i32 = arith.constant 3 : i32
    %21 = tpu.dynamic_rotate %3 by %c3_i32 dim 0 : vector<16x128xf32>, i32 -> vector<16x128xf32>
    %c3_i32_8 = arith.constant 3 : i32
    %22 = vector.broadcast %c3_i32_8 : i32 to vector<16x1xi32>
    %23 = arith.cmpi sge, %20, %22 : vector<16x1xi32>
    %c19_i32 = arith.constant 19 : i32
    %24 = vector.broadcast %c19_i32 : i32 to vector<16x1xi32>
    %25 = arith.cmpi slt, %20, %24 : vector<16x1xi32>
    %26 = arith.andi %23, %25 : vector<16x1xi1>
    %cst = arith.constant 0.000000e+00 : f32
    %27 = vector.shape_cast %26 : vector<16x1xi1> to vector<16x1xi1>
    %28 = vector.broadcast %27 : vector<16x1xi1> to vector<16x128xi1>
    %29 = vector.broadcast %cst : f32 to vector<16x128xf32>
    %30 = arith.select %28, %21, %29 : vector<16x128xi1>, vector<16x128xf32>
    %31 = arith.truncf %30 : vector<16x128xf32> to vector<16x128xbf16>
    %c2_i32 = arith.constant 2 : i32
    %32 = tpu.dynamic_rotate %3 by %c2_i32 dim 0 : vector<16x128xf32>, i32 -> vector<16x128xf32>
    %c2_i32_9 = arith.constant 2 : i32
    %33 = vector.broadcast %c2_i32_9 : i32 to vector<16x1xi32>
    %34 = arith.cmpi sge, %20, %33 : vector<16x1xi32>
    %c18_i32 = arith.constant 18 : i32
    %35 = vector.broadcast %c18_i32 : i32 to vector<16x1xi32>
    %36 = arith.cmpi slt, %20, %35 : vector<16x1xi32>
    %37 = arith.andi %34, %36 : vector<16x1xi1>
    %cst_10 = arith.constant 0.000000e+00 : f32
    %38 = vector.shape_cast %37 : vector<16x1xi1> to vector<16x1xi1>
    %39 = vector.broadcast %38 : vector<16x1xi1> to vector<16x128xi1>
    %40 = vector.broadcast %cst_10 : f32 to vector<16x128xf32>
    %41 = arith.select %39, %32, %40 : vector<16x128xi1>, vector<16x128xf32>
    %42 = arith.truncf %41 : vector<16x128xf32> to vector<16x128xbf16>
    %c1_i32_11 = arith.constant 1 : i32
    %43 = tpu.dynamic_rotate %3 by %c1_i32_11 dim 0 : vector<16x128xf32>, i32 -> vector<16x128xf32>
    %c1_i32_12 = arith.constant 1 : i32
    %44 = vector.broadcast %c1_i32_12 : i32 to vector<16x1xi32>
    %45 = arith.cmpi sge, %20, %44 : vector<16x1xi32>
    %c17_i32 = arith.constant 17 : i32
    %46 = vector.broadcast %c17_i32 : i32 to vector<16x1xi32>
    %47 = arith.cmpi slt, %20, %46 : vector<16x1xi32>
    %48 = arith.andi %45, %47 : vector<16x1xi1>
    %cst_13 = arith.constant 0.000000e+00 : f32
    %49 = vector.shape_cast %48 : vector<16x1xi1> to vector<16x1xi1>
    %50 = vector.broadcast %49 : vector<16x1xi1> to vector<16x128xi1>
    %51 = vector.broadcast %cst_13 : f32 to vector<16x128xf32>
    %52 = arith.select %50, %43, %51 : vector<16x128xi1>, vector<16x128xf32>
    %53 = arith.truncf %52 : vector<16x128xf32> to vector<16x128xbf16>
    %54 = arith.truncf %3 : vector<16x128xf32> to vector<16x128xbf16>
    %c15_i32 = arith.constant 15 : i32
    %55 = tpu.dynamic_rotate %3 by %c15_i32 dim 0 : vector<16x128xf32>, i32 -> vector<16x128xf32>
    %c-1_i32 = arith.constant -1 : i32
    %56 = vector.broadcast %c-1_i32 : i32 to vector<16x1xi32>
    %57 = arith.cmpi sge, %20, %56 : vector<16x1xi32>
    %c15_i32_14 = arith.constant 15 : i32
    %58 = vector.broadcast %c15_i32_14 : i32 to vector<16x1xi32>
    %59 = arith.cmpi slt, %20, %58 : vector<16x1xi32>
    %60 = arith.andi %57, %59 : vector<16x1xi1>
    %cst_15 = arith.constant 0.000000e+00 : f32
    %61 = vector.shape_cast %60 : vector<16x1xi1> to vector<16x1xi1>
    %62 = vector.broadcast %61 : vector<16x1xi1> to vector<16x128xi1>
    %63 = vector.broadcast %cst_15 : f32 to vector<16x128xf32>
    %64 = arith.select %62, %55, %63 : vector<16x128xi1>, vector<16x128xf32>
    %65 = arith.truncf %64 : vector<16x128xf32> to vector<16x128xbf16>
    %c14_i32 = arith.constant 14 : i32
    %66 = tpu.dynamic_rotate %3 by %c14_i32 dim 0 : vector<16x128xf32>, i32 -> vector<16x128xf32>
    %c-2_i32 = arith.constant -2 : i32
    %67 = vector.broadcast %c-2_i32 : i32 to vector<16x1xi32>
    %68 = arith.cmpi sge, %20, %67 : vector<16x1xi32>
    %c14_i32_16 = arith.constant 14 : i32
    %69 = vector.broadcast %c14_i32_16 : i32 to vector<16x1xi32>
    %70 = arith.cmpi slt, %20, %69 : vector<16x1xi32>
    %71 = arith.andi %68, %70 : vector<16x1xi1>
    %cst_17 = arith.constant 0.000000e+00 : f32
    %72 = vector.shape_cast %71 : vector<16x1xi1> to vector<16x1xi1>
    %73 = vector.broadcast %72 : vector<16x1xi1> to vector<16x128xi1>
    %74 = vector.broadcast %cst_17 : f32 to vector<16x128xf32>
    %75 = arith.select %73, %66, %74 : vector<16x128xi1>, vector<16x128xf32>
    %76 = arith.truncf %75 : vector<16x128xf32> to vector<16x128xbf16>
    %c13_i32 = arith.constant 13 : i32
    %77 = tpu.dynamic_rotate %3 by %c13_i32 dim 0 : vector<16x128xf32>, i32 -> vector<16x128xf32>
    %c-3_i32 = arith.constant -3 : i32
    %78 = vector.broadcast %c-3_i32 : i32 to vector<16x1xi32>
    %79 = arith.cmpi sge, %20, %78 : vector<16x1xi32>
    %c13_i32_18 = arith.constant 13 : i32
    %80 = vector.broadcast %c13_i32_18 : i32 to vector<16x1xi32>
    %81 = arith.cmpi slt, %20, %80 : vector<16x1xi32>
    %82 = arith.andi %79, %81 : vector<16x1xi1>
    %cst_19 = arith.constant 0.000000e+00 : f32
    %83 = vector.shape_cast %82 : vector<16x1xi1> to vector<16x1xi1>
    %84 = vector.broadcast %83 : vector<16x1xi1> to vector<16x128xi1>
    %85 = vector.broadcast %cst_19 : f32 to vector<16x128xf32>
    %86 = arith.select %84, %77, %85 : vector<16x128xi1>, vector<16x128xf32>
    %87 = arith.truncf %86 : vector<16x128xf32> to vector<16x128xbf16>
    %88 = tpu.concatenate %31, %42, %53, %54, %65, %76, %87 in 1 : vector<16x128xbf16>, vector<16x128xbf16>, vector<16x128xbf16>, vector<16x128xbf16>, vector<16x128xbf16>, vector<16x128xbf16>, vector<16x128xbf16> -> vector<16x896xbf16>
    %c0_20 = arith.constant 0 : index
    %c0_21 = arith.constant 0 : index
    %89 = vector.load %arg3[%c0_20, %c0_21] : memref<896x256xbf16, #tpu.memory_space<vmem>>, vector<896x256xbf16>
    %cst_22 = arith.constant dense<0.000000e+00> : vector<16x256xf32>
    %90 = tpu.matmul %88, %89, %cst_22 {dimension_numbers = #tpu.dot_dimension_numbers<[1], [0], [0], [1], [0, 0, 1, 1], [], []>} : vector<16x896xbf16>, vector<896x256xbf16>, vector<16x256xf32> -> vector<16x256xf32>
    %c0_23 = arith.constant 0 : index
    %c0_24 = arith.constant 0 : index
    %91 = vector.load %arg4[%c0_23, %c0_24] : memref<1x256xf32, #tpu.memory_space<vmem>>, vector<1x256xf32>
    %92 = vector.broadcast %91 : vector<1x256xf32> to vector<16x256xf32>
    %93 = arith.addf %90, %92 : vector<16x256xf32>
    %94 = vector.extract_strided_slice %93 {offsets = [0, 0], sizes = [16, 128], strides = [1, 1]} : vector<16x256xf32> to vector<16x128xf32>
    %95 = arith.negf %94 : vector<16x128xf32>
    %96 = math.exp %95 : vector<16x128xf32>
    %cst_25 = arith.constant 1.000000e+00 : f32
    %97 = vector.broadcast %cst_25 : f32 to vector<16x128xf32>
    %98 = arith.addf %97, %96 : vector<16x128xf32>
    %99 = arith.divf %97, %98 : vector<16x128xf32>
    %100 = vector.extract_strided_slice %93 {offsets = [0, 128], sizes = [16, 128], strides = [1, 1]} : vector<16x256xf32> to vector<16x128xf32>
    %101 = arith.negf %100 : vector<16x128xf32>
    %102 = math.exp %101 : vector<16x128xf32>
    %cst_26 = arith.constant 1.000000e+00 : f32
    %103 = vector.broadcast %cst_26 : f32 to vector<16x128xf32>
    %104 = arith.addf %103, %102 : vector<16x128xf32>
    %105 = arith.divf %103, %104 : vector<16x128xf32>
    %c0_27 = arith.constant 0 : index
    %c0_28 = arith.constant 0 : index
    %c0_29 = arith.constant 0 : index
    %106 = vector.load %arg1[%c0_27, %c0_28, %c0_29] : memref<1x16x128xf32, #tpu.memory_space<vmem>>, vector<1x16x128xf32>
    %107 = vector.shape_cast %106 : vector<1x16x128xf32> to vector<16x128xf32>
    %c0_30 = arith.constant 0 : index
    %c0_31 = arith.constant 0 : index
    %c0_32 = arith.constant 0 : index
    %108 = vector.load %arg2[%c0_30, %c0_31, %c0_32] : memref<1x16x128xf32, #tpu.memory_space<vmem>>, vector<1x16x128xf32>
    %109 = vector.shape_cast %108 : vector<1x16x128xf32> to vector<16x128xf32>
    %110 = arith.mulf %107, %99 : vector<16x128xf32>
    %111 = arith.mulf %109, %105 : vector<16x128xf32>
    %112 = arith.addf %110, %111 : vector<16x128xf32>
    %113 = vector.shape_cast %112 : vector<16x128xf32> to vector<1x16x128xf32>
    %c0_33 = arith.constant 0 : index
    %c0_34 = arith.constant 0 : index
    %c0_35 = arith.constant 0 : index
    %114 = vector.load %arg5[%c0_33, %c0_34, %c0_35] : memref<1x16x128xf32, #tpu.memory_space<vmem>>, vector<1x16x128xf32>
    tpu.vector_store %arg5[%c0_33, %c0_34, %c0_35], %113 {strides = array<i32>} : memref<1x16x128xf32, #tpu.memory_space<vmem>>, vector<1x16x128xf32>,
    return
  }
  func.func @transform_0(%arg0: i32) -> (i32, i32, i32) {
    %c0_i32 = arith.constant 0 : i32
    %c0_i32_0 = arith.constant 0 : i32
    %c0_i32_1 = arith.constant 0 : i32
    return %arg0, %c0_i32, %c0_i32_0 : i32, i32, i32
  }
  func.func @transform_1(%arg0: i32) -> (i32, i32, i32) {
    %c0_i32 = arith.constant 0 : i32
    %c0_i32_0 = arith.constant 0 : i32
    %c0_i32_1 = arith.constant 0 : i32
    return %arg0, %c0_i32, %c0_i32_0 : i32, i32, i32
  }
  func.func @transform_2(%arg0: i32) -> (i32, i32) {
    %c0_i32 = arith.constant 0 : i32
    %c0_i32_0 = arith.constant 0 : i32
    %c0_i32_1 = arith.constant 0 : i32
    return %c0_i32, %c0_i32_0 : i32, i32
  }
  func.func @transform_3(%arg0: i32) -> (i32, i32) {
    %c0_i32 = arith.constant 0 : i32
    %c0_i32_0 = arith.constant 0 : i32
    %c0_i32_1 = arith.constant 0 : i32
    return %c0_i32, %c0_i32_0 : i32, i32
  }
  func.func @transform_4(%arg0: i32) -> (i32, i32, i32) {
    %c0_i32 = arith.constant 0 : i32
    %c0_i32_0 = arith.constant 0 : i32
    %c0_i32_1 = arith.constant 0 : i32
    return %arg0, %c0_i32, %c0_i32_0 : i32, i32, i32
  }
}

</mosaic_0001>

<llo_original>
// kernel: tpu_custom_call.1
$region0: #{tpu_custom_call.1}
  #allocation0 [shape = 'u32[]', space=smem, size = 0x4, offset = 0x4, fixed_abs, tag = 'smem constant byte address 0x4 - core index']
  #allocation1 [shape = 'u32[144,128]{1,0:T(1,128)}', space=vmem, size = 0x12000, scoped, tag = 'internal scratch']
  %s0 = inlined_call_operand.hbm [shape: f32[2,16,128], index: 0, kind: input, shape index: {}]
  %s1 = inlined_call_operand.hbm [shape: f32[2,16,128], index: 1, kind: input, shape index: {}]
  %s2 = inlined_call_operand.hbm [shape: bf16[896,256], index: 2, kind: input, shape index: {}]
  %s3 = inlined_call_operand.vmem [shape: f32[1,256], index: 3, kind: input, shape index: {}]
  %s4 = inlined_call_operand.hbm [shape: f32[2,16,128], index: 4, kind: output, shape index: {}]
  %s5 = sld [smem:[#allocation0]]
  $region61: #{tpu_custom_call.1} parent=0
    _
  %s7 = ssub.s32 1, %s5
  %s8 = scalar_select 0, %s7, %s5
  $region1: #{tpu_custom_call.1} parent=0
    #allocation2 [shape = 'u8[16384]{0}', space=vmem, size = 0x4000, scoped, tag = 'input window, operand 0']
    #allocation3 [shape = 's32[2]{0}', space=sflag, size = 0x8, scoped, tag = 'scoped memory for tpu_custom_call.1']
    #allocation4 [shape = 's32[2]{0}', space=sflag, size = 0x8, scoped, tag = 'scoped memory for tpu_custom_call.1']
    #allocation5 [shape = 'u8[16384]{0}', space=vmem, size = 0x4000, scoped, tag = 'input window, operand 1']
    #allocation6 [shape = 's32[2]{0}', space=sflag, size = 0x8, scoped, tag = 'scoped memory for tpu_custom_call.1']
    #allocation7 [shape = 'u8[458752]{0}', space=vmem, size = 0x70000, scoped, tag = 'input window, operand 2, single buffered']
    #allocation8 [shape = 'u8[16384]{0}', space=vmem, size = 0x4000, scoped, tag = 'output window, operand 0']
    %9 = vsyncpa [#allocation3], 0
    %s10 = scalar_lea.sflag [#allocation3], 1
    %11 = vsyncpa %s10, 0
    %12 = vsyncpa [#allocation6], 0
    %s13 = scalar_lea.sflag [#allocation6], 1
    %14 = vsyncpa %s13, 0
    %15 = vsyncpa [#allocation4], 0
    %s16 = scalar_lea.sflag [#allocation4], 1
    %17 = vsyncpa %s16, 0
    loop: start=0, step=1, limit=4
    $region2: #{tpu_custom_call.1} parent=1 // loop_pre_header
      _
    $region3: #{tpu_custom_call.1} parent=1 // loop_header
      %s19 = sphi 0, %s23
      %p20 = scmp.ge.s32.totalorder %s19, 4
      %s29 = sphi 0, %s31
      %s32 = sphi 0, %s29
      %s33 = sphi 0, %s32
      %s49 = sphi 0, %s33
      %s55 = sphi 0, %s57
      %s58 = sphi 0, %s55
      %s59 = sphi 0, %s58
      %s75 = sphi 0, %s59
      %s79 = sphi 0, %s79
      %s81 = sphi 0, %s79
      %s82 = sphi 0, %s81
      %s96 = sphi 0, %s82
      %s100 = sphi 0, %s100
      %s102 = sphi 0, %s100
      %s103 = sphi 0, %s102
      %s117 = sphi 0, %s103
      %s123 = sphi 0, %s125
      %s126 = sphi 0, %s123
      %s127 = sphi 0, %s126
      %s143 = sphi 0, %s127
    $region4: #{tpu_custom_call.1} parent=1 // loop_header_branch
      %22 = sbr.rel (%p20) target = $region8
    $region5: #{tpu_custom_call.1} parent=1 // loop_body
      %s24 = ssub.s32 %s19, 1
      %s25 = ssub.s32 %s19, 2
      %s26 = sadd.s32 %s19, 1
      %s27 = ssub.s32 %s19, %s26
      %p28 = scmp.eq.s32.totalorder %s27, 0
      %s30 = sadd.s32 %s29, 1
      %s31 = scalar_select %p28, %s29, %s30
      %p34 = pneg %p28
      %p35 = scmp.eq.s32.totalorder %s19, 1
      %p36 = por %p34, %p35
      %p37 = scmp.ne.s32.totalorder %s29, %s32
      %p38 = scmp.eq.s32.totalorder %s19, 0
      %p39 = por %p37, %p38
      %p40 = scmp.ne.s32.totalorder %s29, %s32
      %p41 = scmp.eq.s32.totalorder %s24, 1
      %p42 = por %p40, %p41
      %p43 = scmp.ne.s32.totalorder %s32, %s33
      %p44 = scmp.eq.s32.totalorder %s24, 0
      %p45 = por %p43, %p44
      %p46 = scmp.ne.s32.totalorder %s32, %s33
      %p47 = scmp.eq.s32.totalorder %s25, 1
      %p48 = por %p46, %p47
      %p50 = scmp.ne.s32.totalorder %s33, %s49
      %p51 = scmp.eq.s32.totalorder %s25, 0
      %p52 = por %p50, %p51
      %s53 = ssub.s32 %s19, %s26
      %p54 = scmp.eq.s32.totalorder %s53, 0
      %s56 = sadd.s32 %s55, 1
      %s57 = scalar_select %p54, %s55, %s56
      %p60 = pneg %p54
      %p61 = scmp.eq.s32.totalorder %s19, 1
      %p62 = por %p60, %p61
      %p63 = scmp.ne.s32.totalorder %s55, %s58
      %p64 = scmp.eq.s32.totalorder %s19, 0
      %p65 = por %p63, %p64
      %p66 = scmp.ne.s32.totalorder %s55, %s58
      %p67 = scmp.eq.s32.totalorder %s24, 1
      %p68 = por %p66, %p67
      %p69 = scmp.ne.s32.totalorder %s58, %s59
      %p70 = scmp.eq.s32.totalorder %s24, 0
      %p71 = por %p69, %p70
      %p72 = scmp.ne.s32.totalorder %s58, %s59
      %p73 = scmp.eq.s32.totalorder %s25, 1
      %p74 = por %p72, %p73
      %p76 = scmp.ne.s32.totalorder %s59, %s75
      %p77 = scmp.eq.s32.totalorder %s25, 0
      %p78 = por %p76, %p77
      %s80 = sadd.s32 %s79, 1
      %p83 = scmp.eq.s32.totalorder %s19, 1
      %p84 = scmp.ne.s32.totalorder %s79, %s81
      %p85 = scmp.eq.s32.totalorder %s19, 0
      %p86 = por %p84, %p85
      %p87 = scmp.ne.s32.totalorder %s79, %s81
      %p88 = scmp.eq.s32.totalorder %s24, 1
      %p89 = por %p87, %p88
      %p90 = scmp.ne.s32.totalorder %s81, %s82
      %p91 = scmp.eq.s32.totalorder %s24, 0
      %p92 = por %p90, %p91
      %p93 = scmp.ne.s32.totalorder %s81, %s82
      %p94 = scmp.eq.s32.totalorder %s25, 1
      %p95 = por %p93, %p94
      %p97 = scmp.ne.s32.totalorder %s82, %s96
      %p98 = scmp.eq.s32.totalorder %s25, 0
      %p99 = por %p97, %p98
      %s101 = sadd.s32 %s100, 1
      %p104 = scmp.eq.s32.totalorder %s19, 1
      %p105 = scmp.ne.s32.totalorder %s100, %s102
      %p106 = scmp.eq.s32.totalorder %s19, 0
      %p107 = por %p105, %p106
      %p108 = scmp.ne.s32.totalorder %s100, %s102
      %p109 = scmp.eq.s32.totalorder %s24, 1
      %p110 = por %p108, %p109
      %p111 = scmp.ne.s32.totalorder %s102, %s103
      %p112 = scmp.eq.s32.totalorder %s24, 0
      %p113 = por %p111, %p112
      %p114 = scmp.ne.s32.totalorder %s102, %s103
      %p115 = scmp.eq.s32.totalorder %s25, 1
      %p116 = por %p114, %p115
      %p118 = scmp.ne.s32.totalorder %s103, %s117
      %p119 = scmp.eq.s32.totalorder %s25, 0
      %p120 = por %p118, %p119
      %s121 = ssub.s32 %s19, %s26
      %p122 = scmp.eq.s32.totalorder %s121, 0
      %s124 = sadd.s32 %s123, 1
      %s125 = scalar_select %p122, %s123, %s124
      %p128 = pneg %p122
      %p129 = scmp.eq.s32.totalorder %s19, 1
      %p130 = por %p128, %p129
      %p131 = scmp.ne.s32.totalorder %s123, %s126
      %p132 = scmp.eq.s32.totalorder %s19, 0
      %p133 = por %p131, %p132
      %p134 = scmp.ne.s32.totalorder %s123, %s126
      %p135 = scmp.eq.s32.totalorder %s24, 1
      %p136 = por %p134, %p135
      %p137 = scmp.ne.s32.totalorder %s126, %s127
      %p138 = scmp.eq.s32.totalorder %s24, 0
      %p139 = por %p137, %p138
      %p140 = scmp.ne.s32.totalorder %s126, %s127
      %p141 = scmp.eq.s32.totalorder %s25, 1
      %p142 = por %p140, %p141
      %p144 = scmp.ne.s32.totalorder %s127, %s143
      %p145 = scmp.eq.s32.totalorder %s25, 0
      %p146 = por %p144, %p145
      %p147 = scmp.le.s32.totalorder 1, %s19
      %p148 = scmp.lt.s32.totalorder %s19, 3
      %p149 = pnand %p147, %p148
      %p150 = pneg %p149
      // Predicated region
      $region9: #{tpu_custom_call.1} parent=5 // pred_check
        _
      $region10: #{tpu_custom_call.1} parent=5 // pred_check_branch
        %152 = sbr.rel (%p149) target = $region12
      $region11: #{tpu_custom_call.1} parent=5 // pred_region
        %s153 = ssub.s32 %s19, 1
        // Predicated region
        $region13: #{tpu_custom_call.1} parent=11 // pred_check
          %p154 = pneg %p92
        $region14: #{tpu_custom_call.1} parent=11 // pred_check_branch
          %156 = sbr.rel (%p154) target = $region16
        $region15: #{tpu_custom_call.1} parent=11 // pred_region
          %s158 = ssub.s32 14336, 14336
          %159 = vsyncadd [#allocation6], %s158
          %s160 = sshll.u32 [#allocation7], 4
          %s161 = int_to_ptr.vmem [resolvable:$true] %s160
          %166 = dma.hbm_to_vmem [thread:$0]  %s2, 14336, %s161, [#allocation6], 128, 128, 8
        $region16: #{tpu_custom_call.1} parent=11 // pred_fallthru
          _
        // Predicated region
        $region17: #{tpu_custom_call.1} parent=11 // pred_check
          %p167 = pneg %p113
        $region18: #{tpu_custom_call.1} parent=11 // pred_check_branch
          %169 = sbr.rel (%p167) target = $region20
        $region19: #{tpu_custom_call.1} parent=11 // pred_region
          _
        $region20: #{tpu_custom_call.1} parent=11 // pred_fallthru
          _
      $region12: #{tpu_custom_call.1} parent=5 // pred_fallthru
        _
      %p170 = scmp.lt.s32.totalorder %s19, 2
      // Predicated region
      $region21: #{tpu_custom_call.1} parent=5 // pred_check
        %p171 = pneg %p170
      $region22: #{tpu_custom_call.1} parent=5 // pred_check_branch
        %173 = sbr.rel (%p171) target = $region24
      $region23: #{tpu_custom_call.1} parent=5 // pred_region
        // Predicated region
        $region25: #{tpu_custom_call.1} parent=23 // pred_check
          %p174 = pneg %p39
        $region26: #{tpu_custom_call.1} parent=23 // pred_check_branch
          %176 = sbr.rel (%p174) target = $region28
        $region27: #{tpu_custom_call.1} parent=23 // pred_region
          %s177 = sand.u32 %s29, 1
          %s178 = scalar_lea.sflag [#allocation3], %s177
          %s179 = sand.u32 %s29, 1
          %s180 = smul.addr %s179, 16
          %s181 = scalar_lea.vmem [#allocation2], %s180
          %s183 = ssub.s32 256, 256
          %184 = vsyncadd %s178, %s183
          %s185 = smul.addr %s19, 2
          %s186 = smul.addr %s185, 128
          %s187 = scalar_lea.hbm %s0, %s186
          %s188 = sshll.u32 %s181, 4
          %s189 = int_to_ptr.vmem [resolvable:$true] %s188
          %194 = dma.hbm_to_vmem [thread:$0]  %s187, 256, %s189, %s178, 128, 128, 8
        $region28: #{tpu_custom_call.1} parent=23 // pred_fallthru
          _
        // Predicated region
        $region29: #{tpu_custom_call.1} parent=23 // pred_check
          %p195 = pneg %p65
        $region30: #{tpu_custom_call.1} parent=23 // pred_check_branch
          %197 = sbr.rel (%p195) target = $region32
        $region31: #{tpu_custom_call.1} parent=23 // pred_region
          %s198 = sand.u32 %s19, 1
          %s199 = scalar_lea.sflag [#allocation6], %s198
          %s200 = sand.u32 %s55, 1
          %s201 = smul.addr %s200, 16
          %s202 = scalar_lea.vmem [#allocation5], %s201
          %s204 = ssub.s32 256, 256
          %205 = vsyncadd %s199, %s204
          %s206 = smul.addr %s19, 2
          %s207 = smul.addr %s206, 128
          %s208 = scalar_lea.hbm %s1, %s207
          %s209 = sshll.u32 %s202, 4
          %s210 = int_to_ptr.vmem [resolvable:$true] %s209
          %215 = dma.hbm_to_vmem [thread:$0]  %s208, 256, %s210, %s199, 128, 128, 8
        $region32: #{tpu_custom_call.1} parent=23 // pred_fallthru
          _
      $region24: #{tpu_custom_call.1} parent=5 // pred_fallthru
        _
      %p216 = scmp.le.s32.totalorder 1, %s19
      %p217 = scmp.lt.s32.totalorder %s19, 3
      %p218 = pnand %p216, %p217
      %p219 = pneg %p218
      // Predicated region
      $region33: #{tpu_custom_call.1} parent=5 // pred_check
        _
      $region34: #{tpu_custom_call.1} parent=5 // pred_check_branch
        %221 = sbr.rel (%p218) target = $region36
      $region35: #{tpu_custom_call.1} parent=5 // pred_region
        %s222 = ssub.s32 %s19, 1
        %s223 = sand.u32 %s32, 1
        %s224 = scalar_lea.sflag [#allocation3], %s223
        %s225 = sand.u32 %s32, 1
        %s226 = smul.addr %s225, 16
        %s227 = scalar_lea.vmem [#allocation2], %s226
        // Predicated region
        $region37: #{tpu_custom_call.1} parent=35 // pred_check
          %p228 = pneg %p45
        $region38: #{tpu_custom_call.1} parent=35 // pred_check_branch
          %230 = sbr.rel (%p228) target = $region40
        $region39: #{tpu_custom_call.1} parent=35 // pred_region
          %231 = dma.done %s224, 256
        $region40: #{tpu_custom_call.1} parent=35 // pred_fallthru
          _
        %s232 = sand.u32 %s24, 1
        %s233 = scalar_lea.sflag [#allocation6], %s232
        %s234 = sand.u32 %s58, 1
        %s235 = smul.addr %s234, 16
        %s236 = scalar_lea.vmem [#allocation5], %s235
        // Predicated region
        $region41: #{tpu_custom_call.1} parent=35 // pred_check
          %p237 = pneg %p71
        $region42: #{tpu_custom_call.1} parent=35 // pred_check_branch
          %239 = sbr.rel (%p237) target = $region44
        $region43: #{tpu_custom_call.1} parent=35 // pred_region
          %240 = dma.done %s233, 256
        $region44: #{tpu_custom_call.1} parent=35 // pred_fallthru
          _
        // Predicated region
        $region45: #{tpu_custom_call.1} parent=35 // pred_check
          %p241 = pneg %p92
        $region46: #{tpu_custom_call.1} parent=35 // pred_check_branch
          %243 = sbr.rel (%p241) target = $region48
        $region47: #{tpu_custom_call.1} parent=35 // pred_region
          %244 = dma.done [#allocation6], 14336
        $region48: #{tpu_custom_call.1} parent=35 // pred_fallthru
          _
        %s245 = sand.u32 %s32, 1
        %s246 = scalar_lea.sflag [#allocation3], %s245
        %s247 = sand.u32 %s32, 1
        %s248 = smul.addr %s247, 16
        %s249 = scalar_lea.vmem [#allocation2], %s248
        %p250 = pneg %p45
        %p251 = pneg %p42
        %s252 = sand.u32 %s24, 1
        %s253 = scalar_lea.sflag [#allocation6], %s252
        %s254 = sand.u32 %s58, 1
        %s255 = smul.addr %s254, 16
        %s256 = scalar_lea.vmem [#allocation5], %s255
        %p257 = pneg %p71
        %p258 = pneg %p68
        %p259 = pneg %p92
        %p260 = pneg %p89
        %p261 = pneg %p113
        %p262 = pneg %p110
        %p263 = pneg %p139
        %p264 = pneg %p136
        %s265 = sand.u32 %s126, 1
        %s266 = scalar_lea.sflag [#allocation4], %s265
        %s267 = sand.u32 %s126, 1
        %s268 = smul.addr %s267, 16
        %s269 = scalar_lea.vmem [#allocation8], %s268
        %v271 = vld [vmem:[%s227] sm:$0xff]
        %v272 = vld [vmem:[%s227 + $0x8] sm:$0xff]
        %v273 = vld [vmem:[%s236] sm:$0xff]
        %v274 = vld [vmem:[%s236 + $0x8] sm:$0xff]
        %v275 = vadd.f32 %v271, %v273
        %v276 = vadd.f32 %v272, %v274
        %v277 = vlaneseq
        %v278 = vshrl.u32 %v277, 7
        %v279 = vadd.s32 %v278, 8
        %vm280 = vcmp.lt.s32.totalorder %v278, 0
        %v281 = vsub.s32 0, %v278
        %v282 = vsel %vm280, %v281, %v278
        %v283 = vshrl.u32 %v282, 4
        %v284 = vand.u32 %v282, 15
        %v285 = vsub.s32 0, %v284
        %v286 = vsel %vm280, %v285, %v284
        %vm287 = vcmp.lt.s32.totalorder %v279, 0
        %v288 = vsub.s32 0, %v279
        %v289 = vsel %vm287, %v288, %v279
        %v290 = vshrl.u32 %v289, 4
        %v291 = vand.u32 %v289, 15
        %v292 = vsub.s32 0, %v291
        %v293 = vsel %vm287, %v292, %v291
        %vm294 = vcmp.ne.s32.totalorder %v286, 0
        %vm295 = vcmp.ne.s32.totalorder %v293, 0
        %vm296 = vcmp.lt.s32.totalorder %v286, 0
        %vm297 = vcmp.lt.s32.totalorder %v293, 0
        %vm298 = vmand %vm296, %vm294
        %vm299 = vmand %vm297, %vm295
        %v300 = vadd.s32 %v286, 16
        %v301 = vadd.s32 %v293, 16
        %v302 = vsel %vm298, %v300, %v286
        %v303 = vsel %vm299, %v301, %v293
        %v304 = vrot.slane %v275, 5
        %v305 = vrot.slane %v276, 5
        %vm306 = vcmp.lt.s32.totalorder %v278, 3
        %v307 = vsel %vm306, %v304, %v305
        %v308 = vsel %vm306, %v305, %v304
        %vm309 = vcmp.ge.s32.totalorder %v302, 3
        %vm310 = vcmp.ge.s32.totalorder %v303, 3
        %vm311 = vcmp.lt.s32.totalorder %v302, 19
        %vm312 = vcmp.lt.s32.totalorder %v303, 19
        %vm313 = vmand %vm309, %vm311
        %vm314 = vmand %vm310, %vm312
        %v315 = vsel %vm313, 1, 0
        %v316 = vsel %vm314, 1, 0
        %vm317 = vcmp.eq.s32.totalorder %v315, 1
        %vm318 = vcmp.eq.s32.totalorder %v316, 1
        %v319 = vsel %vm317, %v308, 0.0
        %v320 = vsel %vm318, %v307, 0.0
        %v321 = vpack.c.bf16 %v320, %v319
        %v322 = vrot.slane %v275, 6
        %v323 = vrot.slane %v276, 6
        %vm324 = vcmp.lt.s32.totalorder %v278, 2
        %v325 = vsel %vm324, %v322, %v323
        %v326 = vsel %vm324, %v323, %v322
        %vm327 = vcmp.ge.s32.totalorder %v302, 2
        %vm328 = vcmp.ge.s32.totalorder %v303, 2
        %vm329 = vcmp.lt.s32.totalorder %v302, 18
        %vm330 = vcmp.lt.s32.totalorder %v303, 18
        %vm331 = vmand %vm327, %vm329
        %vm332 = vmand %vm328, %vm330
        %v333 = vsel %vm331, 1, 0
        %v334 = vsel %vm332, 1, 0
        %vm335 = vcmp.eq.s32.totalorder %v333, 1
        %vm336 = vcmp.eq.s32.totalorder %v334, 1
        %v337 = vsel %vm335, %v326, 0.0
        %v338 = vsel %vm336, %v325, 0.0
        %v339 = vpack.c.bf16 %v338, %v337
        %v340 = vrot.slane %v275, 7
        %v341 = vrot.slane %v276, 7
        %vm342 = vcmp.lt.s32.totalorder %v278, 1
        %v343 = vsel %vm342, %v340, %v341
        %v344 = vsel %vm342, %v341, %v340
        %vm345 = vcmp.ge.s32.totalorder %v302, 1
        %vm346 = vcmp.ge.s32.totalorder %v303, 1
        %vm347 = vcmp.lt.s32.totalorder %v302, 17
        %vm348 = vcmp.lt.s32.totalorder %v303, 17
        %vm349 = vmand %vm345, %vm347
        %vm350 = vmand %vm346, %vm348
        %v351 = vsel %vm349, 1, 0
        %v352 = vsel %vm350, 1, 0
        %vm353 = vcmp.eq.s32.totalorder %v351, 1
        %vm354 = vcmp.eq.s32.totalorder %v352, 1
        %v355 = vsel %vm353, %v344, 0.0
        %v356 = vsel %vm354, %v343, 0.0
        %v357 = vpack.c.bf16 %v356, %v355
        %v358 = vpack.c.bf16 %v276, %v275
        %v359 = vrot.slane %v275, 1
        %v360 = vrot.slane %v276, 1
        %vm361 = vcmp.lt.s32.totalorder %v278, 7
        %v362 = vsel %vm361, %v359, %v360
        %v363 = vsel %vm361, %v360, %v359
        %vm364 = vcmp.ge.s32.totalorder %v302, 4294967295
        %vm365 = vcmp.ge.s32.totalorder %v303, 4294967295
        %vm366 = vcmp.lt.s32.totalorder %v302, 15
        %vm367 = vcmp.lt.s32.totalorder %v303, 15
        %vm368 = vmand %vm364, %vm366
        %vm369 = vmand %vm365, %vm367
        %v370 = vsel %vm368, 1, 0
        %v371 = vsel %vm369, 1, 0
        %vm372 = vcmp.eq.s32.totalorder %v370, 1
        %vm373 = vcmp.eq.s32.totalorder %v371, 1
        %v374 = vsel %vm372, %v362, 0.0
        %v375 = vsel %vm373, %v363, 0.0
        %v376 = vpack.c.bf16 %v375, %v374
        %v377 = vrot.slane %v275, 2
        %v378 = vrot.slane %v276, 2
        %vm379 = vcmp.lt.s32.totalorder %v278, 6
        %v380 = vsel %vm379, %v377, %v378
        %v381 = vsel %vm379, %v378, %v377
        %vm382 = vcmp.ge.s32.totalorder %v302, 4294967294
        %vm383 = vcmp.ge.s32.totalorder %v303, 4294967294
        %vm384 = vcmp.lt.s32.totalorder %v302, 14
        %vm385 = vcmp.lt.s32.totalorder %v303, 14
        %vm386 = vmand %vm382, %vm384
        %vm387 = vmand %vm383, %vm385
        %v388 = vsel %vm386, 1, 0
        %v389 = vsel %vm387, 1, 0
        %vm390 = vcmp.eq.s32.totalorder %v388, 1
        %vm391 = vcmp.eq.s32.totalorder %v389, 1
        %v392 = vsel %vm390, %v380, 0.0
        %v393 = vsel %vm391, %v381, 0.0
        %v394 = vpack.c.bf16 %v393, %v392
        %v395 = vrot.slane %v275, 3
        %v396 = vrot.slane %v276, 3
        %vm397 = vcmp.lt.s32.totalorder %v278, 5
        %v398 = vsel %vm397, %v395, %v396
        %v399 = vsel %vm397, %v396, %v395
        %vm400 = vcmp.ge.s32.totalorder %v302, 4294967293
        %vm401 = vcmp.ge.s32.totalorder %v303, 4294967293
        %vm402 = vcmp.lt.s32.totalorder %v302, 13
        %vm403 = vcmp.lt.s32.totalorder %v303, 13
        %vm404 = vmand %vm400, %vm402
        %vm405 = vmand %vm401, %vm403
        %v406 = vsel %vm404, 1, 0
        %v407 = vsel %vm405, 1, 0
        %vm408 = vcmp.eq.s32.totalorder %v406, 1
        %vm409 = vcmp.eq.s32.totalorder %v407, 1
        %v410 = vsel %vm408, %v398, 0.0
        %v411 = vsel %vm409, %v399, 0.0
        %v412 = vpack.c.bf16 %v411, %v410
        %v413 = vld [vmem:[#allocation7] sm:$0xff]
        %v414 = vld [vmem:[#allocation7 + $0x8] sm:$0xff]
        %v415 = vld [vmem:[#allocation7 + $0x10] sm:$0xff]
        %v416 = vld [vmem:[#allocation7 + $0x18] sm:$0xff]
        %v417 = vld [vmem:[#allocation7 + $0x20] sm:$0xff]
        %v418 = vld [vmem:[#allocation7 + $0x28] sm:$0xff]
        %v419 = vld [vmem:[#allocation7 + $0x30] sm:$0xff]
        %v420 = vld [vmem:[#allocation7 + $0x38] sm:$0xff]
        %v421 = vld [vmem:[#allocation7 + $0x40] sm:$0xff]
        %v422 = vld [vmem:[#allocation7 + $0x48] sm:$0xff]
        %v423 = vld [vmem:[#allocation7 + $0x50] sm:$0xff]
        %v424 = vld [vmem:[#allocation7 + $0x58] sm:$0xff]
        %v425 = vld [vmem:[#allocation7 + $0x60] sm:$0xff]
        %v426 = vld [vmem:[#allocation7 + $0x68] sm:$0xff]
        %v427 = vld [vmem:[#allocation7 + $0x70] sm:$0xff]
        %v428 = vld [vmem:[#allocation7 + $0x78] sm:$0xff]
        %v429 = vld [vmem:[#allocation7 + $0x80] sm:$0xff]
        %v430 = vld [vmem:[#allocation7 + $0x88] sm:$0xff]
        %v431 = vld [vmem:[#allocation7 + $0x90] sm:$0xff]
        %v432 = vld [vmem:[#allocation7 + $0x98] sm:$0xff]
        %v433 = vld [vmem:[#allocation7 + $0xa0] sm:$0xff]
        %v434 = vld [vmem:[#allocation7 + $0xa8] sm:$0xff]
        %v435 = vld [vmem:[#allocation7 + $0xb0] sm:$0xff]
        %v436 = vld [vmem:[#allocation7 + $0xb8] sm:$0xff]
        %v437 = vld [vmem:[#allocation7 + $0xc0] sm:$0xff]
        %v438 = vld [vmem:[#allocation7 + $0xc8] sm:$0xff]
        %v439 = vld [vmem:[#allocation7 + $0xd0] sm:$0xff]
        %v440 = vld [vmem:[#allocation7 + $0xd8] sm:$0xff]
        %v441 = vld [vmem:[#allocation7 + $0xe0] sm:$0xff]
        %v442 = vld [vmem:[#allocation7 + $0xe8] sm:$0xff]
        %v443 = vld [vmem:[#allocation7 + $0xf0] sm:$0xff]
        %v444 = vld [vmem:[#allocation7 + $0xf8] sm:$0xff]
        %v445 = vld [vmem:[#allocation7 + $0x100] sm:$0xff]
        %v446 = vld [vmem:[#allocation7 + $0x108] sm:$0xff]
        %v447 = vld [vmem:[#allocation7 + $0x110] sm:$0xff]
        %v448 = vld [vmem:[#allocation7 + $0x118] sm:$0xff]
        %v449 = vld [vmem:[#allocation7 + $0x120] sm:$0xff]
        %v450 = vld [vmem:[#allocation7 + $0x128] sm:$0xff]
        %v451 = vld [vmem:[#allocation7 + $0x130] sm:$0xff]
        %v452 = vld [vmem:[#allocation7 + $0x138] sm:$0xff]
        %v453 = vld [vmem:[#allocation7 + $0x140] sm:$0xff]
        %v454 = vld [vmem:[#allocation7 + $0x148] sm:$0xff]
        %v455 = vld [vmem:[#allocation7 + $0x150] sm:$0xff]
        %v456 = vld [vmem:[#allocation7 + $0x158] sm:$0xff]
        %v457 = vld [vmem:[#allocation7 + $0x160] sm:$0xff]
        %v458 = vld [vmem:[#allocation7 + $0x168] sm:$0xff]
        %v459 = vld [vmem:[#allocation7 + $0x170] sm:$0xff]
        %v460 = vld [vmem:[#allocation7 + $0x178] sm:$0xff]
        %v461 = vld [vmem:[#allocation7 + $0x180] sm:$0xff]
        %v462 = vld [vmem:[#allocation7 + $0x188] sm:$0xff]
        %v463 = vld [vmem:[#allocation7 + $0x190] sm:$0xff]
        %v464 = vld [vmem:[#allocation7 + $0x198] sm:$0xff]
        %v465 = vld [vmem:[#allocation7 + $0x1a0] sm:$0xff]
        %v466 = vld [vmem:[#allocation7 + $0x1a8] sm:$0xff]
        %v467 = vld [vmem:[#allocation7 + $0x1b0] sm:$0xff]
        %v468 = vld [vmem:[#allocation7 + $0x1b8] sm:$0xff]
        %v469 = vld [vmem:[#allocation7 + $0x1c0] sm:$0xff]
        %v470 = vld [vmem:[#allocation7 + $0x1c8] sm:$0xff]
        %v471 = vld [vmem:[#allocation7 + $0x1d0] sm:$0xff]
        %v472 = vld [vmem:[#allocation7 + $0x1d8] sm:$0xff]
        %v473 = vld [vmem:[#allocation7 + $0x1e0] sm:$0xff]
        %v474 = vld [vmem:[#allocation7 + $0x1e8] sm:$0xff]
        %v475 = vld [vmem:[#allocation7 + $0x1f0] sm:$0xff]
        %v476 = vld [vmem:[#allocation7 + $0x1f8] sm:$0xff]
        %v477 = vld [vmem:[#allocation7 + $0x200] sm:$0xff]
        %v478 = vld [vmem:[#allocation7 + $0x208] sm:$0xff]
        %v479 = vld [vmem:[#allocation7 + $0x210] sm:$0xff]
        %v480 = vld [vmem:[#allocation7 + $0x218] sm:$0xff]
        %v481 = vld [vmem:[#allocation7 + $0x220] sm:$0xff]
        %v482 = vld [vmem:[#allocation7 + $0x228] sm:$0xff]
        %v483 = vld [vmem:[#allocation7 + $0x230] sm:$0xff]
        %v484 = vld [vmem:[#allocation7 + $0x238] sm:$0xff]
        %v485 = vld [vmem:[#allocation7 + $0x240] sm:$0xff]
        %v486 = vld [vmem:[#allocation7 + $0x248] sm:$0xff]
        %v487 = vld [vmem:[#allocation7 + $0x250] sm:$0xff]
        %v488 = vld [vmem:[#allocation7 + $0x258] sm:$0xff]
        %v489 = vld [vmem:[#allocation7 + $0x260] sm:$0xff]
        %v490 = vld [vmem:[#allocation7 + $0x268] sm:$0xff]
        %v491 = vld [vmem:[#allocation7 + $0x270] sm:$0xff]
        %v492 = vld [vmem:[#allocation7 + $0x278] sm:$0xff]
        %v493 = vld [vmem:[#allocation7 + $0x280] sm:$0xff]
        %v494 = vld [vmem:[#allocation7 + $0x288] sm:$0xff]
        %v495 = vld [vmem:[#allocation7 + $0x290] sm:$0xff]
        %v496 = vld [vmem:[#allocation7 + $0x298] sm:$0xff]
        %v497 = vld [vmem:[#allocation7 + $0x2a0] sm:$0xff]
        %v498 = vld [vmem:[#allocation7 + $0x2a8] sm:$0xff]
        %v499 = vld [vmem:[#allocation7 + $0x2b0] sm:$0xff]
        %v500 = vld [vmem:[#allocation7 + $0x2b8] sm:$0xff]
        %v501 = vld [vmem:[#allocation7 + $0x2c0] sm:$0xff]
        %v502 = vld [vmem:[#allocation7 + $0x2c8] sm:$0xff]
        %v503 = vld [vmem:[#allocation7 + $0x2d0] sm:$0xff]
        %v504 = vld [vmem:[#allocation7 + $0x2d8] sm:$0xff]
        %v505 = vld [vmem:[#allocation7 + $0x2e0] sm:$0xff]
        %v506 = vld [vmem:[#allocation7 + $0x2e8] sm:$0xff]
        %v507 = vld [vmem:[#allocation7 + $0x2f0] sm:$0xff]
        %v508 = vld [vmem:[#allocation7 + $0x2f8] sm:$0xff]
        %v509 = vld [vmem:[#allocation7 + $0x300] sm:$0xff]
        %v510 = vld [vmem:[#allocation7 + $0x308] sm:$0xff]
        %v511 = vld [vmem:[#allocation7 + $0x310] sm:$0xff]
        %v512 = vld [vmem:[#allocation7 + $0x318] sm:$0xff]
        %v513 = vld [vmem:[#allocation7 + $0x320] sm:$0xff]
        %v514 = vld [vmem:[#allocation7 + $0x328] sm:$0xff]
        %v515 = vld [vmem:[#allocation7 + $0x330] sm:$0xff]
        %v516 = vld [vmem:[#allocation7 + $0x338] sm:$0xff]
        %v517 = vld [vmem:[#allocation7 + $0x340] sm:$0xff]
        %v518 = vld [vmem:[#allocation7 + $0x348] sm:$0xff]
        %v519 = vld [vmem:[#allocation7 + $0x350] sm:$0xff]
        %v520 = vld [vmem:[#allocation7 + $0x358] sm:$0xff]
        %v521 = vld [vmem:[#allocation7 + $0x360] sm:$0xff]
        %v522 = vld [vmem:[#allocation7 + $0x368] sm:$0xff]
        %v523 = vld [vmem:[#allocation7 + $0x370] sm:$0xff]
        %v524 = vld [vmem:[#allocation7 + $0x378] sm:$0xff]
        %v525 = vld [vmem:[%s3] sm:$0x3]
        %v527 = vlaneseq
        %v528 = vshrl.u32 %v527, 7
        %v529 = vsub.s32 0, %v528
        %v530 = vrot.slane %v525, %v529
        %v531 = vlaneseq
        %v532 = vshrl.u32 %v531, 7
        %v533 = vsub.s32 1, %v532
        %v534 = vrot.slane %v525, %v533
        %v649 = vunpack.c.l.b16 %v413
        %v650 = vunpack.c.h.b16 %v413
        %v651 = vunpack.c.l.b16 %v414
        %v652 = vunpack.c.h.b16 %v414
        %v653 = vunpack.c.l.b16 %v415
        %v654 = vunpack.c.h.b16 %v415
        %v655 = vunpack.c.l.b16 %v416
        %v656 = vunpack.c.h.b16 %v416
        %v657 = vunpack.c.l.b16 %v417
        %v658 = vunpack.c.h.b16 %v417
        %v659 = vunpack.c.l.b16 %v418
        %v660 = vunpack.c.h.b16 %v418
        %v661 = vunpack.c.l.b16 %v419
        %v662 = vunpack.c.h.b16 %v419
        %v663 = vunpack.c.l.b16 %v420
        %v664 = vunpack.c.h.b16 %v420
        %v665 = vunpack.c.l.b16 %v421
        %v666 = vunpack.c.h.b16 %v421
        %v667 = vunpack.c.l.b16 %v422
        %v668 = vunpack.c.h.b16 %v422
        %v669 = vunpack.c.l.b16 %v423
        %v670 = vunpack.c.h.b16 %v423
        %v671 = vunpack.c.l.b16 %v424
        %v672 = vunpack.c.h.b16 %v424
        %v673 = vunpack.c.l.b16 %v425
        %v674 = vunpack.c.h.b16 %v425
        %v675 = vunpack.c.l.b16 %v426
        %v676 = vunpack.c.h.b16 %v426
        %v677 = vunpack.c.l.b16 %v427
        %v678 = vunpack.c.h.b16 %v427
        %v679 = vunpack.c.l.b16 %v428
        %v680 = vunpack.c.h.b16 %v428
        %v681 = vunpack.c.l.b16 %v429
        %v682 = vunpack.c.h.b16 %v429
        %v683 = vunpack.c.l.b16 %v430
        %v684 = vunpack.c.h.b16 %v430
        %v685 = vunpack.c.l.b16 %v431
        %v686 = vunpack.c.h.b16 %v431
        %v687 = vunpack.c.l.b16 %v432
        %v688 = vunpack.c.h.b16 %v432
        %v689 = vunpack.c.l.b16 %v433
        %v690 = vunpack.c.h.b16 %v433
        %v691 = vunpack.c.l.b16 %v434
        %v692 = vunpack.c.h.b16 %v434
        %v693 = vunpack.c.l.b16 %v435
        %v694 = vunpack.c.h.b16 %v435
        %v695 = vunpack.c.l.b16 %v436
        %v696 = vunpack.c.h.b16 %v436
        %v697 = vunpack.c.l.b16 %v437
        %v698 = vunpack.c.h.b16 %v437
        %v699 = vunpack.c.l.b16 %v438
        %v700 = vunpack.c.h.b16 %v438
        %v701 = vunpack.c.l.b16 %v439
        %v702 = vunpack.c.h.b16 %v439
        %v703 = vunpack.c.l.b16 %v440
        %v704 = vunpack.c.h.b16 %v440
        %v705 = vunpack.c.l.b16 %v441
        %v706 = vunpack.c.h.b16 %v441
        %v707 = vunpack.c.l.b16 %v442
        %v708 = vunpack.c.h.b16 %v442
        %v709 = vunpack.c.l.b16 %v443
        %v710 = vunpack.c.h.b16 %v443
        %v711 = vunpack.c.l.b16 %v444
        %v712 = vunpack.c.h.b16 %v444
        %v713 = vunpack.c.l.b16 %v445
        %v714 = vunpack.c.h.b16 %v445
        %v715 = vunpack.c.l.b16 %v446
        %v716 = vunpack.c.h.b16 %v446
        %v717 = vunpack.c.l.b16 %v447
        %v718 = vunpack.c.h.b16 %v447
        %v719 = vunpack.c.l.b16 %v448
        %v720 = vunpack.c.h.b16 %v448
        %v721 = vunpack.c.l.b16 %v449
        %v722 = vunpack.c.h.b16 %v449
        %v723 = vunpack.c.l.b16 %v450
        %v724 = vunpack.c.h.b16 %v450
        %v725 = vunpack.c.l.b16 %v451
        %v726 = vunpack.c.h.b16 %v451
        %v727 = vunpack.c.l.b16 %v452
        %v728 = vunpack.c.h.b16 %v452
        %v729 = vunpack.c.l.b16 %v453
        %v730 = vunpack.c.h.b16 %v453
        %v731 = vunpack.c.l.b16 %v454
        %v732 = vunpack.c.h.b16 %v454
        %v733 = vunpack.c.l.b16 %v455
        %v734 = vunpack.c.h.b16 %v455
        %v735 = vunpack.c.l.b16 %v456
        %v736 = vunpack.c.h.b16 %v456
        %v737 = vunpack.c.l.b16 %v457
        %v738 = vunpack.c.h.b16 %v457
        %v739 = vunpack.c.l.b16 %v458
        %v740 = vunpack.c.h.b16 %v458
        %v741 = vunpack.c.l.b16 %v459
        %v742 = vunpack.c.h.b16 %v459
        %v743 = vunpack.c.l.b16 %v460
        %v744 = vunpack.c.h.b16 %v460
        %v745 = vunpack.c.l.b16 %v461
        %v746 = vunpack.c.h.b16 %v461
        %v747 = vunpack.c.l.b16 %v462
        %v748 = vunpack.c.h.b16 %v462
        %v749 = vunpack.c.l.b16 %v463
        %v750 = vunpack.c.h.b16 %v463
        %v751 = vunpack.c.l.b16 %v464
        %v752 = vunpack.c.h.b16 %v464
        %v753 = vunpack.c.l.b16 %v465
        %v754 = vunpack.c.h.b16 %v465
        %v755 = vunpack.c.l.b16 %v466
        %v756 = vunpack.c.h.b16 %v466
        %v757 = vunpack.c.l.b16 %v467
        %v758 = vunpack.c.h.b16 %v467
        %v759 = vunpack.c.l.b16 %v468
        %v760 = vunpack.c.h.b16 %v468
        %v761 = vunpack.c.l.b16 %v469
        %v762 = vunpack.c.h.b16 %v469
        %v763 = vunpack.c.l.b16 %v470
        %v764 = vunpack.c.h.b16 %v470
        %v765 = vunpack.c.l.b16 %v471
        %v766 = vunpack.c.h.b16 %v471
        %v767 = vunpack.c.l.b16 %v472
        %v768 = vunpack.c.h.b16 %v472
        %v769 = vunpack.c.l.b16 %v473
        %v770 = vunpack.c.h.b16 %v473
        %v771 = vunpack.c.l.b16 %v474
        %v772 = vunpack.c.h.b16 %v474
        %v773 = vunpack.c.l.b16 %v475
        %v774 = vunpack.c.h.b16 %v475
        %v775 = vunpack.c.l.b16 %v476
        %v776 = vunpack.c.h.b16 %v476
        %v777 = vunpack.c.l.b16 %v477
        %v778 = vunpack.c.h.b16 %v477
        %v779 = vunpack.c.l.b16 %v478
        %v780 = vunpack.c.h.b16 %v478
        %v781 = vunpack.c.l.b16 %v479
        %v782 = vunpack.c.h.b16 %v479
        %v783 = vunpack.c.l.b16 %v480
        %v784 = vunpack.c.h.b16 %v480
        %v785 = vunpack.c.l.b16 %v481
        %v786 = vunpack.c.h.b16 %v481
        %v787 = vunpack.c.l.b16 %v482
        %v788 = vunpack.c.h.b16 %v482
        %v789 = vunpack.c.l.b16 %v483
        %v790 = vunpack.c.h.b16 %v483
        %v791 = vunpack.c.l.b16 %v484
        %v792 = vunpack.c.h.b16 %v484
        %v793 = vunpack.c.l.b16 %v485
        %v794 = vunpack.c.h.b16 %v485
        %v795 = vunpack.c.l.b16 %v486
        %v796 = vunpack.c.h.b16 %v486
        %v797 = vunpack.c.l.b16 %v487
        %v798 = vunpack.c.h.b16 %v487
        %v799 = vunpack.c.l.b16 %v488
        %v800 = vunpack.c.h.b16 %v488
        %v801 = vunpack.c.l.b16 %v489
        %v802 = vunpack.c.h.b16 %v489
        %v803 = vunpack.c.l.b16 %v490
        %v804 = vunpack.c.h.b16 %v490
        %v805 = vunpack.c.l.b16 %v491
        %v806 = vunpack.c.h.b16 %v491
        %v807 = vunpack.c.l.b16 %v492
        %v808 = vunpack.c.h.b16 %v492
        %v809 = vunpack.c.l.b16 %v493
        %v810 = vunpack.c.h.b16 %v493
        %v811 = vunpack.c.l.b16 %v494
        %v812 = vunpack.c.h.b16 %v494
        %v813 = vunpack.c.l.b16 %v495
        %v814 = vunpack.c.h.b16 %v495
        %v815 = vunpack.c.l.b16 %v496
        %v816 = vunpack.c.h.b16 %v496
        %v817 = vunpack.c.l.b16 %v497
        %v818 = vunpack.c.h.b16 %v497
        %v819 = vunpack.c.l.b16 %v498
        %v820 = vunpack.c.h.b16 %v498
        %v821 = vunpack.c.l.b16 %v499
        %v822 = vunpack.c.h.b16 %v499
        %v823 = vunpack.c.l.b16 %v500
        %v824 = vunpack.c.h.b16 %v500
        %v825 = vunpack.c.l.b16 %v501
        %v826 = vunpack.c.h.b16 %v501
        %v827 = vunpack.c.l.b16 %v502
        %v828 = vunpack.c.h.b16 %v502
        %v829 = vunpack.c.l.b16 %v503
        %v830 = vunpack.c.h.b16 %v503
        %v831 = vunpack.c.l.b16 %v504
        %v832 = vunpack.c.h.b16 %v504
        %v833 = vunpack.c.l.b16 %v505
        %v834 = vunpack.c.h.b16 %v505
        %v835 = vunpack.c.l.b16 %v506
        %v836 = vunpack.c.h.b16 %v506
        %v837 = vunpack.c.l.b16 %v507
        %v838 = vunpack.c.h.b16 %v507
        %v839 = vunpack.c.l.b16 %v508
        %v840 = vunpack.c.h.b16 %v508
        %v841 = vunpack.c.l.b16 %v509
        %v842 = vunpack.c.h.b16 %v509
        %v843 = vunpack.c.l.b16 %v510
        %v844 = vunpack.c.h.b16 %v510
        %v845 = vunpack.c.l.b16 %v511
        %v846 = vunpack.c.h.b16 %v511
        %v847 = vunpack.c.l.b16 %v512
        %v848 = vunpack.c.h.b16 %v512
        %v849 = vunpack.c.l.b16 %v513
        %v850 = vunpack.c.h.b16 %v513
        %v851 = vunpack.c.l.b16 %v514
        %v852 = vunpack.c.h.b16 %v514
        %v853 = vunpack.c.l.b16 %v515
        %v854 = vunpack.c.h.b16 %v515
        %v855 = vunpack.c.l.b16 %v516
        %v856 = vunpack.c.h.b16 %v516
        %v857 = vunpack.c.l.b16 %v517
        %v858 = vunpack.c.h.b16 %v517
        %v859 = vunpack.c.l.b16 %v518
        %v860 = vunpack.c.h.b16 %v518
        %v861 = vunpack.c.l.b16 %v519
        %v862 = vunpack.c.h.b16 %v519
        %v863 = vunpack.c.l.b16 %v520
        %v864 = vunpack.c.h.b16 %v520
        %v865 = vunpack.c.l.b16 %v521
        %v866 = vunpack.c.h.b16 %v521
        %v867 = vunpack.c.l.b16 %v522
        %v868 = vunpack.c.h.b16 %v522
        %v869 = vunpack.c.l.b16 %v523
        %v870 = vunpack.c.h.b16 %v523
        %v871 = vunpack.c.l.b16 %v524
        %v872 = vunpack.c.h.b16 %v524
        %v873 = vpack.c.b16 %v651, %v649
        %v874 = vpack.c.b16 %v652, %v650
        %v875 = vpack.c.b16 %v655, %v653
        %v876 = vpack.c.b16 %v656, %v654
        %v877 = vpack.c.b16 %v659, %v657
        %v878 = vpack.c.b16 %v660, %v658
        %v879 = vpack.c.b16 %v663, %v661
        %v880 = vpack.c.b16 %v664, %v662
        %v881 = vpack.c.b16 %v667, %v665
        %v882 = vpack.c.b16 %v668, %v666
        %v883 = vpack.c.b16 %v671, %v669
        %v884 = vpack.c.b16 %v672, %v670
        %v885 = vpack.c.b16 %v675, %v673
        %v886 = vpack.c.b16 %v676, %v674
        %v887 = vpack.c.b16 %v679, %v677
        %v888 = vpack.c.b16 %v680, %v678
        %v889 = vpack.c.b16 %v683, %v681
        %v890 = vpack.c.b16 %v684, %v682
        %v891 = vpack.c.b16 %v687, %v685
        %v892 = vpack.c.b16 %v688, %v686
        %v893 = vpack.c.b16 %v691, %v689
        %v894 = vpack.c.b16 %v692, %v690
        %v895 = vpack.c.b16 %v695, %v693
        %v896 = vpack.c.b16 %v696, %v694
        %v897 = vpack.c.b16 %v699, %v697
        %v898 = vpack.c.b16 %v700, %v698
        %v899 = vpack.c.b16 %v703, %v701
        %v900 = vpack.c.b16 %v704, %v702
        %v901 = vpack.c.b16 %v707, %v705
        %v902 = vpack.c.b16 %v708, %v706
        %v903 = vpack.c.b16 %v711, %v709
        %v904 = vpack.c.b16 %v712, %v710
        %v905 = vpack.c.b16 %v715, %v713
        %v906 = vpack.c.b16 %v716, %v714
        %v907 = vpack.c.b16 %v719, %v717
        %v908 = vpack.c.b16 %v720, %v718
        %v909 = vpack.c.b16 %v723, %v721
        %v910 = vpack.c.b16 %v724, %v722
        %v911 = vpack.c.b16 %v727, %v725
        %v912 = vpack.c.b16 %v728, %v726
        %v913 = vpack.c.b16 %v731, %v729
        %v914 = vpack.c.b16 %v732, %v730
        %v915 = vpack.c.b16 %v735, %v733
        %v916 = vpack.c.b16 %v736, %v734
        %v917 = vpack.c.b16 %v739, %v737
        %v918 = vpack.c.b16 %v740, %v738
        %v919 = vpack.c.b16 %v743, %v741
        %v920 = vpack.c.b16 %v744, %v742
        %v921 = vpack.c.b16 %v747, %v745
        %v922 = vpack.c.b16 %v748, %v746
        %v923 = vpack.c.b16 %v751, %v749
        %v924 = vpack.c.b16 %v752, %v750
        %v925 = vpack.c.b16 %v755, %v753
        %v926 = vpack.c.b16 %v756, %v754
        %v927 = vpack.c.b16 %v759, %v757
        %v928 = vpack.c.b16 %v760, %v758
        %v929 = vpack.c.b16 %v763, %v761
        %v930 = vpack.c.b16 %v764, %v762
        %v931 = vpack.c.b16 %v767, %v765
        %v932 = vpack.c.b16 %v768, %v766
        %v933 = vpack.c.b16 %v771, %v769
        %v934 = vpack.c.b16 %v772, %v770
        %v935 = vpack.c.b16 %v775, %v773
        %v936 = vpack.c.b16 %v776, %v774
        %v937 = vpack.c.b16 %v779, %v777
        %v938 = vpack.c.b16 %v780, %v778
        %v939 = vpack.c.b16 %v783, %v781
        %v940 = vpack.c.b16 %v784, %v782
        %v941 = vpack.c.b16 %v787, %v785
        %v942 = vpack.c.b16 %v788, %v786
        %v943 = vpack.c.b16 %v791, %v789
        %v944 = vpack.c.b16 %v792, %v790
        %v945 = vpack.c.b16 %v795, %v793
        %v946 = vpack.c.b16 %v796, %v794
        %v947 = vpack.c.b16 %v799, %v797
        %v948 = vpack.c.b16 %v800, %v798
        %v949 = vpack.c.b16 %v803, %v801
        %v950 = vpack.c.b16 %v804, %v802
        %v951 = vpack.c.b16 %v807, %v805
        %v952 = vpack.c.b16 %v808, %v806
        %v953 = vpack.c.b16 %v811, %v809
        %v954 = vpack.c.b16 %v812, %v810
        %v955 = vpack.c.b16 %v815, %v813
        %v956 = vpack.c.b16 %v816, %v814
        %v957 = vpack.c.b16 %v819, %v817
        %v958 = vpack.c.b16 %v820, %v818
        %v959 = vpack.c.b16 %v823, %v821
        %v960 = vpack.c.b16 %v824, %v822
        %v961 = vpack.c.b16 %v827, %v825
        %v962 = vpack.c.b16 %v828, %v826
        %v963 = vpack.c.b16 %v831, %v829
        %v964 = vpack.c.b16 %v832, %v830
        %v965 = vpack.c.b16 %v835, %v833
        %v966 = vpack.c.b16 %v836, %v834
        %v967 = vpack.c.b16 %v839, %v837
        %v968 = vpack.c.b16 %v840, %v838
        %v969 = vpack.c.b16 %v843, %v841
        %v970 = vpack.c.b16 %v844, %v842
        %v971 = vpack.c.b16 %v847, %v845
        %v972 = vpack.c.b16 %v848, %v846
        %v973 = vpack.c.b16 %v851, %v849
        %v974 = vpack.c.b16 %v852, %v850
        %v975 = vpack.c.b16 %v855, %v853
        %v976 = vpack.c.b16 %v856, %v854
        %v977 = vpack.c.b16 %v859, %v857
        %v978 = vpack.c.b16 %v860, %v858
        %v979 = vpack.c.b16 %v863, %v861
        %v980 = vpack.c.b16 %v864, %v862
        %v981 = vpack.c.b16 %v867, %v865
        %v982 = vpack.c.b16 %v868, %v866
        %v983 = vpack.c.b16 %v871, %v869
        %v984 = vpack.c.b16 %v872, %v870
        %1097 = vmatprep.subr.bf16.mxu0 %v874
        %1098 = vmatpush1.bf16.msra.mxu0 %v873
        %1099 = vmatprep.subr.bf16.mxu0 %v876
        %1100 = vmatpush1.bf16.msra.mxu0 %v875
        %1101 = vmatprep.subr.bf16.mxu0 %v878
        %1102 = vmatpush1.bf16.msra.mxu0 %v877
        %1103 = vmatprep.subr.bf16.mxu0 %v880
        %1104 = vmatpush1.bf16.msra.mxu0 %v879
        %1105 = vmatprep.subr.bf16.mxu0 %v882
        %1106 = vmatpush1.bf16.msra.mxu0 %v881
        %1107 = vmatprep.subr.bf16.mxu0 %v884
        %1108 = vmatpush1.bf16.msra.mxu0 %v883
        %1109 = vmatprep.subr.bf16.mxu0 %v886
        %1110 = vmatpush1.bf16.msra.mxu0 %v885
        %1111 = vmatprep.subr.bf16.mxu0 %v888
        %1112 = vmatpush1.bf16.msra.mxu0 %v887
        %1113 = vmatprep.subr.bf16.mxu0 %v890
        %1114 = vmatpush1.bf16.msra.mxu0 %v889
        %1115 = vmatprep.subr.bf16.mxu0 %v892
        %1116 = vmatpush1.bf16.msra.mxu0 %v891
        %1117 = vmatprep.subr.bf16.mxu0 %v894
        %1118 = vmatpush1.bf16.msra.mxu0 %v893
        %1119 = vmatprep.subr.bf16.mxu0 %v896
        %1120 = vmatpush1.bf16.msra.mxu0 %v895
        %1121 = vmatprep.subr.bf16.mxu0 %v898
        %1122 = vmatpush1.bf16.msra.mxu0 %v897
        %1123 = vmatprep.subr.bf16.mxu0 %v900
        %1124 = vmatpush1.bf16.msra.mxu0 %v899
        %1125 = vmatprep.subr.bf16.mxu0 %v902
        %1126 = vmatpush1.bf16.msra.mxu0 %v901
        %1127 = vmatprep.subr.bf16.mxu0 %v904
        %1128 = vmatpush1.bf16.msra.mxu0 %v903
        %1129 = vmatprep.mubr.bf16.mxu0 %v339
        %1130 = vmatmul.mubr.bf16.gmra.mrb[0].mxu0 %v321
        %v1131 = vpop.f32.mrb[0].mxu0
        %v1132 = vadd.f32 %v530, %v1131
        %v1133 = vpop.f32.mrb[0].mxu0
        %v1134 = vadd.f32 %v534, %v1133
        %v1135 = vpop.f32.mrb[0].mxu0
        %v1136 = vadd.f32 %v530, %v1135
        %v1137 = vpop.f32.mrb[0].mxu0
        %v1138 = vadd.f32 %v534, %v1137
        %1139 = vdwg.mxu0
        %1140 = vmatprep.subr.bf16.mxu0 %v906
        %1141 = vmatpush1.bf16.msra.mxu0 %v905
        %1142 = vmatprep.subr.bf16.mxu0 %v908
        %1143 = vmatpush1.bf16.msra.mxu0 %v907
        %1144 = vmatprep.subr.bf16.mxu0 %v910
        %1145 = vmatpush1.bf16.msra.mxu0 %v909
        %1146 = vmatprep.subr.bf16.mxu0 %v912
        %1147 = vmatpush1.bf16.msra.mxu0 %v911
        %1148 = vmatprep.subr.bf16.mxu0 %v914
        %1149 = vmatpush1.bf16.msra.mxu0 %v913
        %1150 = vmatprep.subr.bf16.mxu0 %v916
        %1151 = vmatpush1.bf16.msra.mxu0 %v915
        %1152 = vmatprep.subr.bf16.mxu0 %v918
        %1153 = vmatpush1.bf16.msra.mxu0 %v917
        %1154 = vmatprep.subr.bf16.mxu0 %v920
        %1155 = vmatpush1.bf16.msra.mxu0 %v919
        %1156 = vmatprep.subr.bf16.mxu0 %v922
        %1157 = vmatpush1.bf16.msra.mxu0 %v921
        %1158 = vmatprep.subr.bf16.mxu0 %v924
        %1159 = vmatpush1.bf16.msra.mxu0 %v923
        %1160 = vmatprep.subr.bf16.mxu0 %v926
        %1161 = vmatpush1.bf16.msra.mxu0 %v925
        %1162 = vmatprep.subr.bf16.mxu0 %v928
        %1163 = vmatpush1.bf16.msra.mxu0 %v927
        %1164 = vmatprep.subr.bf16.mxu0 %v930
        %1165 = vmatpush1.bf16.msra.mxu0 %v929
        %1166 = vmatprep.subr.bf16.mxu0 %v932
        %1167 = vmatpush1.bf16.msra.mxu0 %v931
        %1168 = vmatprep.subr.bf16.mxu0 %v934
        %1169 = vmatpush1.bf16.msra.mxu0 %v933
        %1170 = vmatprep.subr.bf16.mxu0 %v936
        %1171 = vmatpush1.bf16.msra.mxu0 %v935
        %1172 = vmatprep.mubr.bf16.mxu0 %v358
        %1173 = vmatmul.mubr.bf16.gmra.mrb[0].mxu0 %v357
        %v1174 = vpop.f32.mrb[0].mxu0
        %v1175 = vadd.f32 %v1132, %v1174
        %v1176 = vpop.f32.mrb[0].mxu0
        %v1177 = vadd.f32 %v1134, %v1176
        %v1178 = vpop.f32.mrb[0].mxu0
        %v1179 = vadd.f32 %v1136, %v1178
        %v1180 = vpop.f32.mrb[0].mxu0
        %v1181 = vadd.f32 %v1138, %v1180
        %1182 = vdwg.mxu0
        %1183 = vmatprep.subr.bf16.mxu0 %v938
        %1184 = vmatpush1.bf16.msra.mxu0 %v937
        %1185 = vmatprep.subr.bf16.mxu0 %v940
        %1186 = vmatpush1.bf16.msra.mxu0 %v939
        %1187 = vmatprep.subr.bf16.mxu0 %v942
        %1188 = vmatpush1.bf16.msra.mxu0 %v941
        %1189 = vmatprep.subr.bf16.mxu0 %v944
        %1190 = vmatpush1.bf16.msra.mxu0 %v943
        %1191 = vmatprep.subr.bf16.mxu0 %v946
        %1192 = vmatpush1.bf16.msra.mxu0 %v945
        %1193 = vmatprep.subr.bf16.mxu0 %v948
        %1194 = vmatpush1.bf16.msra.mxu0 %v947
        %1195 = vmatprep.subr.bf16.mxu0 %v950
        %1196 = vmatpush1.bf16.msra.mxu0 %v949
        %1197 = vmatprep.subr.bf16.mxu0 %v952
        %1198 = vmatpush1.bf16.msra.mxu0 %v951
        %1199 = vmatprep.subr.bf16.mxu0 %v954
        %1200 = vmatpush1.bf16.msra.mxu0 %v953
        %1201 = vmatprep.subr.bf16.mxu0 %v956
        %1202 = vmatpush1.bf16.msra.mxu0 %v955
        %1203 = vmatprep.subr.bf16.mxu0 %v958
        %1204 = vmatpush1.bf16.msra.mxu0 %v957
        %1205 = vmatprep.subr.bf16.mxu0 %v960
        %1206 = vmatpush1.bf16.msra.mxu0 %v959
        %1207 = vmatprep.subr.bf16.mxu0 %v962
        %1208 = vmatpush1.bf16.msra.mxu0 %v961
        %1209 = vmatprep.subr.bf16.mxu0 %v964
        %1210 = vmatpush1.bf16.msra.mxu0 %v963
        %1211 = vmatprep.subr.bf16.mxu0 %v966
        %1212 = vmatpush1.bf16.msra.mxu0 %v965
        %1213 = vmatprep.subr.bf16.mxu0 %v968
        %1214 = vmatpush1.bf16.msra.mxu0 %v967
        %1215 = vmatprep.mubr.bf16.mxu0 %v394
        %1216 = vmatmul.mubr.bf16.gmra.mrb[0].mxu0 %v376
        %v1217 = vpop.f32.mrb[0].mxu0
        %v1218 = vadd.f32 %v1175, %v1217
        %v1219 = vpop.f32.mrb[0].mxu0
        %v1220 = vadd.f32 %v1177, %v1219
        %v1221 = vpop.f32.mrb[0].mxu0
        %v1222 = vadd.f32 %v1179, %v1221
        %v1223 = vpop.f32.mrb[0].mxu0
        %v1224 = vadd.f32 %v1181, %v1223
        %1225 = vdwg.mxu0
        %1226 = vmatprep.subr.bf16.mxu0 %v970
        %1227 = vmatpush1.bf16.msra.mxu0 %v969
        %1228 = vmatprep.subr.bf16.mxu0 %v972
        %1229 = vmatpush1.bf16.msra.mxu0 %v971
        %1230 = vmatprep.subr.bf16.mxu0 %v974
        %1231 = vmatpush1.bf16.msra.mxu0 %v973
        %1232 = vmatprep.subr.bf16.mxu0 %v976
        %1233 = vmatpush1.bf16.msra.mxu0 %v975
        %1234 = vmatprep.subr.bf16.mxu0 %v978
        %1235 = vmatpush1.bf16.msra.mxu0 %v977
        %1236 = vmatprep.subr.bf16.mxu0 %v980
        %1237 = vmatpush1.bf16.msra.mxu0 %v979
        %1238 = vmatprep.subr.bf16.mxu0 %v982
        %1239 = vmatpush1.bf16.msra.mxu0 %v981
        %1240 = vmatprep.subr.bf16.mxu0 %v984
        %1241 = vmatpush1.bf16.msra.mxu0 %v983
        %1242 = vmatprep.subr.bf16.mxu0 0
        %1243 = vmatpush1.bf16.msra.mxu0 0
        %1244 = vmatprep.subr.bf16.mxu0 0
        %1245 = vmatpush1.bf16.msra.mxu0 0
        %1246 = vmatprep.subr.bf16.mxu0 0
        %1247 = vmatpush1.bf16.msra.mxu0 0
        %1248 = vmatprep.subr.bf16.mxu0 0
        %1249 = vmatpush1.bf16.msra.mxu0 0
        %1250 = vmatprep.subr.bf16.mxu0 0
        %1251 = vmatpush1.bf16.msra.mxu0 0
        %1252 = vmatprep.subr.bf16.mxu0 0
        %1253 = vmatpush1.bf16.msra.mxu0 0
        %1254 = vmatprep.subr.bf16.mxu0 0
        %1255 = vmatpush1.bf16.msra.mxu0 0
        %1256 = vmatprep.subr.bf16.mxu0 0
        %1257 = vmatpush1.bf16.msra.mxu0 0
        %1258 = vmatprep.mubr.bf16.mxu0 0
        %1259 = vmatmul.mubr.bf16.gmra.mrb[0].mxu0 %v412
        %v1260 = vpop.f32.mrb[0].mxu0
        %v1261 = vadd.f32 %v1218, %v1260
        %v1262 = vpop.f32.mrb[0].mxu0
        %v1263 = vadd.f32 %v1220, %v1262
        %v1264 = vpop.f32.mrb[0].mxu0
        %v1265 = vadd.f32 %v1222, %v1264
        %v1266 = vpop.f32.mrb[0].mxu0
        %v1267 = vadd.f32 %v1224, %v1266
        %1268 = vdwg.mxu0
        %v1269 = vxor.u32 %v1261, 2147483648
        %v1270 = vxor.u32 %v1265, 2147483648
        %v1271 = vmul.f32 %v1269, 1.442695
        %v1272 = vpow.pop %v1271
        %v1273 = vmul.f32 %v1270, 1.442695
        %v1274 = vpow.pop %v1273
        %v1275 = vadd.f32 %v1272, 1.0
        %v1276 = vadd.f32 %v1274, 1.0
        %v1277 = vrcp.pop %v1275
        %v1278 = vmul.f32 1.0, %v1277
        %v1279 = vrcp.pop %v1276
        %v1280 = vmul.f32 1.0, %v1279
        %v1281 = vxor.u32 %v1263, 2147483648
        %v1282 = vxor.u32 %v1267, 2147483648
        %v1283 = vmul.f32 %v1281, 1.442695
        %v1284 = vpow.pop %v1283
        %v1285 = vmul.f32 %v1282, 1.442695
        %v1286 = vpow.pop %v1285
        %v1287 = vadd.f32 %v1284, 1.0
        %v1288 = vadd.f32 %v1286, 1.0
        %v1289 = vrcp.pop %v1287
        %v1290 = vmul.f32 1.0, %v1289
        %v1291 = vrcp.pop %v1288
        %v1292 = vmul.f32 1.0, %v1291
        %v1293 = vmul.f32 %v271, %v1278
        %v1294 = vmul.f32 %v272, %v1280
        %v1295 = vmul.f32 %v273, %v1290
        %v1296 = vmul.f32 %v274, %v1292
        %v1297 = vadd.f32 %v1293, %v1295
        %v1298 = vadd.f32 %v1294, %v1296
        %1299 = vst [vmem:[%s269] sm:$0xff] %v1297
        %1300 = vst [vmem:[%s269 + $0x8] sm:$0xff] %v1298
        %s1301 = sand.u32 %s126, 1
        %s1302 = scalar_lea.sflag [#allocation4], %s1301
        %s1303 = sand.u32 %s126, 1
        %s1304 = smul.addr %s1303, 16
        %s1305 = scalar_lea.vmem [#allocation8], %s1304
        // Predicated region
        $region49: #{tpu_custom_call.1} parent=35 // pred_check
          %p1306 = pneg %p136
        $region50: #{tpu_custom_call.1} parent=35 // pred_check_branch
          %1308 = sbr.rel (%p1306) target = $region52
        $region51: #{tpu_custom_call.1} parent=35 // pred_region
          %s1310 = ssub.s32 256, 256
          %1311 = vsyncadd %s1302, %s1310
          %s1312 = smul.addr %s24, 2
          %s1313 = smul.addr %s1312, 128
          %s1314 = scalar_lea.hbm %s4, %s1313
          %s1315 = sshll.u32 %s1305, 4
          %s1316 = int_to_ptr.vmem [resolvable:$true] %s1315
          %1321 = dma.vmem_to_hbm [thread:$0]  %s1316, 256, %s1314, %s1302, 128, 128, 8
        $region52: #{tpu_custom_call.1} parent=35 // pred_fallthru
          _
      $region36: #{tpu_custom_call.1} parent=5 // pred_fallthru
        _
      %p1322 = scmp.le.s32.totalorder 2, %s19
      // Predicated region
      $region53: #{tpu_custom_call.1} parent=5 // pred_check
        %p1323 = pneg %p1322
      $region54: #{tpu_custom_call.1} parent=5 // pred_check_branch
        %1325 = sbr.rel (%p1323) target = $region56
      $region55: #{tpu_custom_call.1} parent=5 // pred_region
        %s1326 = ssub.s32 %s19, 2
        // Predicated region
        $region57: #{tpu_custom_call.1} parent=55 // pred_check
          %p1327 = pneg %p142
        $region58: #{tpu_custom_call.1} parent=55 // pred_check_branch
          %1329 = sbr.rel (%p1327) target = $region60
        $region59: #{tpu_custom_call.1} parent=55 // pred_region
          %s1330 = sand.u32 %s127, 1
          %s1331 = scalar_lea.sflag [#allocation4], %s1330
          %s1332 = sand.u32 %s127, 1
          %s1333 = smul.addr %s1332, 16
          %s1334 = scalar_lea.vmem [#allocation8], %s1333
          %1335 = dma.done %s1331, 256
        $region60: #{tpu_custom_call.1} parent=55 // pred_fallthru
          _
      $region56: #{tpu_custom_call.1} parent=5 // pred_fallthru
        _
    $region6: #{tpu_custom_call.1} parent=1 // loop_footer
      %s23 = sadd.s32 1, %s19
    $region7: #{tpu_custom_call.1} parent=1 // loop_footer_branch
      %18 = sbr.rel target = $region3
    $region8: #{tpu_custom_call.1} parent=1 // loop_exit
      _
    %1336 = vsyncpa [#allocation3], 1
    %s1337 = scalar_lea.sflag [#allocation3], 1
    %1338 = vsyncpa %s1337, 1
    %1339 = vsyncpa [#allocation6], 1
    %s1340 = scalar_lea.sflag [#allocation6], 1
    %1341 = vsyncpa %s1340, 1
    %1342 = vsyncpa [#allocation4], 1
    %s1343 = scalar_lea.sflag [#allocation4], 1
    %1344 = vsyncpa %s1343, 1

</llo_original>
